<compile_context>
chip_gen: v5e
topology: v5e:2x2
jax: 0.10.0
libtpu: 0.0.40
codegen_flags: <defaults>
</compile_context>

<pallas_src>
import jax
import jax.numpy as jnp
from jax.experimental import pallas as pl
from jax.experimental.pallas import tpu as pltpu


def _concat_dma_kernel(a_ref, b_ref, c_ref, d_ref, o_ref, sem):
    # All refs live in HBM.  Copy each input directly into its column band of
    # the output.  Per-row destination stride is 4*C f32 with C=384 contiguous
    # f32 per row, so the strided DMA stays efficient.  Start all four DMAs so
    # they overlap, then wait on all of them.
    C = a_ref.shape[-1]
    copies = []
    for i, src in enumerate((a_ref, b_ref, c_ref, d_ref)):
        cp = pltpu.make_async_copy(src, o_ref.at[:, i * C:(i + 1) * C], sem.at[i])
        cp.start()
        copies.append(cp)
    for cp in copies:
        cp.wait()


def concat_last_dim(x251, x252, x253, x254):
    # Inputs share shape [N, H, W, C]; concat along the last (channel) dim.
    # Flatten to (N*H*W, C) so the channel axis maps to TPU lanes (C = 3*128);
    # this reshape of a contiguous array is metadata-only.
    N, H, W, C = x251.shape
    rows = N * H * W
    flat = [x.reshape(rows, C) for x in (x251, x252, x253, x254)]

    out_flat = pl.pallas_call(
        _concat_dma_kernel,
        out_shape=jax.ShapeDtypeStruct((rows, 4 * C), x251.dtype),
        in_specs=[pl.BlockSpec(memory_space=pl.ANY) for _ in range(4)],
        out_specs=pl.BlockSpec(memory_space=pl.ANY),
        scratch_shapes=[pltpu.SemaphoreType.DMA((4,))],
    )(*flat)

    return out_flat.reshape(N, H, W, 4 * C)


if __name__ == "__main__":
    key = jax.random.PRNGKey(0)
    k1, k2, k3, k4 = jax.random.split(key, 4)
    shape = (1, 7, 7, 384)
    x251 = jax.random.normal(k1, shape, dtype=jnp.float32)
    x252 = jax.random.normal(k2, shape, dtype=jnp.float32)
    x253 = jax.random.normal(k3, shape, dtype=jnp.float32)
    x254 = jax.random.normal(k4, shape, dtype=jnp.float32)

    out = concat_last_dim(x251, x252, x253, x254)
    out = jax.block_until_ready(out)

    # Correctness check against plain JAX concat (same semantics as torch.cat dim=-1).
    ref = jnp.concatenate([x251, x252, x253, x254], axis=-1)
    assert out.shape == (1, 7, 7, 1536), out.shape
    assert jnp.array_equal(out, ref), "mismatch vs reference concat"
    print("KERNEL_OK")
</pallas_src>

<mosaic_0001>
module attributes {stable_mosaic.version = 11 : i64} {
  func.func @_concat_dma_kernel(%arg0: memref<49x384xf32, #tpu.memory_space<any>>, %arg1: memref<49x384xf32, #tpu.memory_space<any>>, %arg2: memref<49x384xf32, #tpu.memory_space<any>>, %arg3: memref<49x384xf32, #tpu.memory_space<any>>, %arg4: memref<49x1536xf32, #tpu.memory_space<any>>, %arg5: memref<4x!tpu.dma_semaphore, #tpu.memory_space<semaphore_mem>>) attributes {dimension_semantics = [], scalar_prefetch = 0 : i64, scratch_operands = 1 : i64, tpu.core_type = #tpu.core_type<tc>} {
    %c0_i32 = arith.constant 0 : i32
    %c0_i32_0 = arith.constant 0 : i32
    %c0_i32_1 = arith.constant 0 : i32
    %0 = tpu.memref_slice %arg4[%c0_i32_0, %c0_i32_1] : memref<49x1536xf32, #tpu.memory_space<any>> -> memref<49x384xf32, #tpu.memory_space<any>>
    %1 = tpu.memref_slice %arg5[%c0_i32] : memref<4x!tpu.dma_semaphore, #tpu.memory_space<semaphore_mem>> -> memref<1x!tpu.dma_semaphore, #tpu.memory_space<semaphore_mem>>
    %2 = tpu.memref_squeeze %1 : memref<1x!tpu.dma_semaphore, #tpu.memory_space<semaphore_mem>> -> memref<!tpu.dma_semaphore, #tpu.memory_space<semaphore_mem>>
    tpu.enqueue_dma source(%arg0 : memref<49x384xf32, #tpu.memory_space<any>>) target(%0 : memref<49x384xf32, #tpu.memory_space<any>>) target_semaphore(%2 : memref<!tpu.dma_semaphore, #tpu.memory_space<semaphore_mem>>)
    %c1_i32 = arith.constant 1 : i32
    %c0_i32_2 = arith.constant 0 : i32
    %c384_i32 = arith.constant 384 : i32
    %3 = tpu.memref_slice %arg4[%c0_i32_2, %c384_i32] : memref<49x1536xf32, #tpu.memory_space<any>> -> memref<49x384xf32, #tpu.memory_space<any>>
    %4 = tpu.memref_slice %arg5[%c1_i32] : memref<4x!tpu.dma_semaphore, #tpu.memory_space<semaphore_mem>> -> memref<1x!tpu.dma_semaphore, #tpu.memory_space<semaphore_mem>>
    %5 = tpu.memref_squeeze %4 : memref<1x!tpu.dma_semaphore, #tpu.memory_space<semaphore_mem>> -> memref<!tpu.dma_semaphore, #tpu.memory_space<semaphore_mem>>
    tpu.enqueue_dma source(%arg1 : memref<49x384xf32, #tpu.memory_space<any>>) target(%3 : memref<49x384xf32, #tpu.memory_space<any>>) target_semaphore(%5 : memref<!tpu.dma_semaphore, #tpu.memory_space<semaphore_mem>>)
    %c2_i32 = arith.constant 2 : i32
    %c0_i32_3 = arith.constant 0 : i32
    %c768_i32 = arith.constant 768 : i32
    %6 = tpu.memref_slice %arg4[%c0_i32_3, %c768_i32] : memref<49x1536xf32, #tpu.memory_space<any>> -> memref<49x384xf32, #tpu.memory_space<any>>
    %7 = tpu.memref_slice %arg5[%c2_i32] : memref<4x!tpu.dma_semaphore, #tpu.memory_space<semaphore_mem>> -> memref<1x!tpu.dma_semaphore, #tpu.memory_space<semaphore_mem>>
    %8 = tpu.memref_squeeze %7 : memref<1x!tpu.dma_semaphore, #tpu.memory_space<semaphore_mem>> -> memref<!tpu.dma_semaphore, #tpu.memory_space<semaphore_mem>>
    tpu.enqueue_dma source(%arg2 : memref<49x384xf32, #tpu.memory_space<any>>) target(%6 : memref<49x384xf32, #tpu.memory_space<any>>) target_semaphore(%8 : memref<!tpu.dma_semaphore, #tpu.memory_space<semaphore_mem>>)
    %c3_i32 = arith.constant 3 : i32
    %c0_i32_4 = arith.constant 0 : i32
    %c1152_i32 = arith.constant 1152 : i32
    %9 = tpu.memref_slice %arg4[%c0_i32_4, %c1152_i32] : memref<49x1536xf32, #tpu.memory_space<any>> -> memref<49x384xf32, #tpu.memory_space<any>>
    %10 = tpu.memref_slice %arg5[%c3_i32] : memref<4x!tpu.dma_semaphore, #tpu.memory_space<semaphore_mem>> -> memref<1x!tpu.dma_semaphore, #tpu.memory_space<semaphore_mem>>
    %11 = tpu.memref_squeeze %10 : memref<1x!tpu.dma_semaphore, #tpu.memory_space<semaphore_mem>> -> memref<!tpu.dma_semaphore, #tpu.memory_space<semaphore_mem>>
    tpu.enqueue_dma source(%arg3 : memref<49x384xf32, #tpu.memory_space<any>>) target(%9 : memref<49x384xf32, #tpu.memory_space<any>>) target_semaphore(%11 : memref<!tpu.dma_semaphore, #tpu.memory_space<semaphore_mem>>)
    %c0_i32_5 = arith.constant 0 : i32
    %c0_i32_6 = arith.constant 0 : i32
    %c0_i32_7 = arith.constant 0 : i32
    %12 = tpu.memref_slice %arg4[%c0_i32_6, %c0_i32_7] : memref<49x1536xf32, #tpu.memory_space<any>> -> memref<49x384xf32, #tpu.memory_space<any>>
    %13 = tpu.memref_slice %arg5[%c0_i32_5] : memref<4x!tpu.dma_semaphore, #tpu.memory_space<semaphore_mem>> -> memref<1x!tpu.dma_semaphore, #tpu.memory_space<semaphore_mem>>
    %14 = tpu.memref_squeeze %13 : memref<1x!tpu.dma_semaphore, #tpu.memory_space<semaphore_mem>> -> memref<!tpu.dma_semaphore, #tpu.memory_space<semaphore_mem>>
    tpu.wait_dma2 semaphore(%14 : memref<!tpu.dma_semaphore, #tpu.memory_space<semaphore_mem>>) src(%arg0 : memref<49x384xf32, #tpu.memory_space<any>>) dst(%12 : memref<49x384xf32, #tpu.memory_space<any>>)
    %c1_i32_8 = arith.constant 1 : i32
    %c0_i32_9 = arith.constant 0 : i32
    %c384_i32_10 = arith.constant 384 : i32
    %15 = tpu.memref_slice %arg4[%c0_i32_9, %c384_i32_10] : memref<49x1536xf32, #tpu.memory_space<any>> -> memref<49x384xf32, #tpu.memory_space<any>>
    %16 = tpu.memref_slice %arg5[%c1_i32_8] : memref<4x!tpu.dma_semaphore, #tpu.memory_space<semaphore_mem>> -> memref<1x!tpu.dma_semaphore, #tpu.memory_space<semaphore_mem>>
    %17 = tpu.memref_squeeze %16 : memref<1x!tpu.dma_semaphore, #tpu.memory_space<semaphore_mem>> -> memref<!tpu.dma_semaphore, #tpu.memory_space<semaphore_mem>>
    tpu.wait_dma2 semaphore(%17 : memref<!tpu.dma_semaphore, #tpu.memory_space<semaphore_mem>>) src(%arg1 : memref<49x384xf32, #tpu.memory_space<any>>) dst(%15 : memref<49x384xf32, #tpu.memory_space<any>>)
    %c2_i32_11 = arith.constant 2 : i32
    %c0_i32_12 = arith.constant 0 : i32
    %c768_i32_13 = arith.constant 768 : i32
    %18 = tpu.memref_slice %arg4[%c0_i32_12, %c768_i32_13] : memref<49x1536xf32, #tpu.memory_space<any>> -> memref<49x384xf32, #tpu.memory_space<any>>
    %19 = tpu.memref_slice %arg5[%c2_i32_11] : memref<4x!tpu.dma_semaphore, #tpu.memory_space<semaphore_mem>> -> memref<1x!tpu.dma_semaphore, #tpu.memory_space<semaphore_mem>>
    %20 = tpu.memref_squeeze %19 : memref<1x!tpu.dma_semaphore, #tpu.memory_space<semaphore_mem>> -> memref<!tpu.dma_semaphore, #tpu.memory_space<semaphore_mem>>
    tpu.wait_dma2 semaphore(%20 : memref<!tpu.dma_semaphore, #tpu.memory_space<semaphore_mem>>) src(%arg2 : memref<49x384xf32, #tpu.memory_space<any>>) dst(%18 : memref<49x384xf32, #tpu.memory_space<any>>)
    %c3_i32_14 = arith.constant 3 : i32
    %c0_i32_15 = arith.constant 0 : i32
    %c1152_i32_16 = arith.constant 1152 : i32
    %21 = tpu.memref_slice %arg4[%c0_i32_15, %c1152_i32_16] : memref<49x1536xf32, #tpu.memory_space<any>> -> memref<49x384xf32, #tpu.memory_space<any>>
    %22 = tpu.memref_slice %arg5[%c3_i32_14] : memref<4x!tpu.dma_semaphore, #tpu.memory_space<semaphore_mem>> -> memref<1x!tpu.dma_semaphore, #tpu.memory_space<semaphore_mem>>
    %23 = tpu.memref_squeeze %22 : memref<1x!tpu.dma_semaphore, #tpu.memory_space<semaphore_mem>> -> memref<!tpu.dma_semaphore, #tpu.memory_space<semaphore_mem>>
    tpu.wait_dma2 semaphore(%23 : memref<!tpu.dma_semaphore, #tpu.memory_space<semaphore_mem>>) src(%arg3 : memref<49x384xf32, #tpu.memory_space<any>>) dst(%21 : memref<49x384xf32, #tpu.memory_space<any>>)
    return
  }
}

</mosaic_0001>

<llo_original>
// kernel: tpu_custom_call.1
$region0: #{tpu_custom_call.1}
  #allocation0 [shape = 'u32[]', space=smem, size = 0x4, offset = 0x4, fixed_abs, tag = 'smem constant byte address 0x4 - core index']
  #allocation1 [shape = 'u32[72,128]{1,0:T(1,128)}', space=vmem, size = 0x9000, scoped, tag = 'internal scratch']
  #allocation2 [shape = 's32[4]{0}', space=sflag, size = 0x10, scoped, tag = 'scratch operand']
  #allocation3 [shape = 's32[]', space=sflag, size = 0x4, offset = 0, fixed_abs, tag = 'sflag constant byte address 0x0 - dummy sync flag']
  #allocation5 [shape = 's32[]', space=sflag, size = 0x4, offset = 0, fixed_abs, tag = 'sflag constant byte address 0x0 - dummy sync flag']
  #allocation7 [shape = 's32[]', space=sflag, size = 0x4, offset = 0, fixed_abs, tag = 'sflag constant byte address 0x0 - dummy sync flag']
  #allocation9 [shape = 's32[]', space=sflag, size = 0x4, offset = 0, fixed_abs, tag = 'sflag constant byte address 0x0 - dummy sync flag']
  %s0 = inlined_call_operand.hbm [shape: f32[49,384], index: 0, kind: input, shape index: {}]
  %s1 = inlined_call_operand.hbm [shape: f32[49,384], index: 1, kind: input, shape index: {}]
  %s2 = inlined_call_operand.hbm [shape: f32[49,384], index: 2, kind: input, shape index: {}]
  %s3 = inlined_call_operand.hbm [shape: f32[49,384], index: 3, kind: input, shape index: {}]
  %s4 = inlined_call_operand.hbm [shape: f32[49,1536], index: 4, kind: output, shape index: {}]
  %s5 = sld [smem:[#allocation0]]
  $region2: #{tpu_custom_call.1} parent=0
    _
  %s7 = ssub.s32 1, %s5
  %s8 = scalar_select 0, %s7, %s5
  $region1: #{tpu_custom_call.1} parent=0
    #allocation4 [shape = 'u32[3]{0}', space=smem, size = 0xc, scoped, tag = 'DMA stride descriptor']
    #allocation6 [shape = 'u32[3]{0}', space=smem, size = 0xc, scoped, tag = 'DMA stride descriptor']
    #allocation8 [shape = 'u32[3]{0}', space=smem, size = 0xc, scoped, tag = 'DMA stride descriptor']
    #allocation10 [shape = 'u32[3]{0}', space=smem, size = 0xc, scoped, tag = 'DMA stride descriptor']
    %s10 = sshll.u32 1, 14
    %s11 = sxor.u32 4294967295, %s10
    %s13 = sshll.u32 %s0, 4
    %s14 = int_to_ptr.hbm [resolvable:$true] %s13
    %s15 = sshll.u32 %s4, 4
    %s16 = int_to_ptr.hbm [resolvable:$true] %s15
    %20 = sst [smem:[#allocation4]] 384
    %s21 = scalar_lea.smem [#allocation4], 1
    %22 = sst [smem:[%s21]] 1536
    %s23 = scalar_lea.smem [#allocation4], 2
    %24 = sst [smem:[%s23]] 24
    %26 = dma.general %s14, 2688, %s16, [#allocation2], [#allocation3], [#allocation4], 0, 0
    %s27 = scalar_lea.hbm %s4, 24
    %s28 = scalar_lea.sflag [#allocation2], 1
    %s30 = sshll.u32 1, 14
    %s31 = sxor.u32 4294967295, %s30
    %s33 = sshll.u32 %s1, 4
    %s34 = int_to_ptr.hbm [resolvable:$true] %s33
    %s35 = sshll.u32 %s27, 4
    %s36 = int_to_ptr.hbm [resolvable:$true] %s35
    %40 = sst [smem:[#allocation6]] 384
    %s41 = scalar_lea.smem [#allocation6], 1
    %42 = sst [smem:[%s41]] 1536
    %s43 = scalar_lea.smem [#allocation6], 2
    %44 = sst [smem:[%s43]] 24
    %46 = dma.general %s34, 2688, %s36, %s28, [#allocation5], [#allocation6], 0, 0
    %s47 = scalar_lea.hbm %s4, 48
    %s48 = scalar_lea.sflag [#allocation2], 2
    %s50 = sshll.u32 1, 14
    %s51 = sxor.u32 4294967295, %s50
    %s53 = sshll.u32 %s2, 4
    %s54 = int_to_ptr.hbm [resolvable:$true] %s53
    %s55 = sshll.u32 %s47, 4
    %s56 = int_to_ptr.hbm [resolvable:$true] %s55
    %60 = sst [smem:[#allocation8]] 384
    %s61 = scalar_lea.smem [#allocation8], 1
    %62 = sst [smem:[%s61]] 1536
    %s63 = scalar_lea.smem [#allocation8], 2
    %64 = sst [smem:[%s63]] 24
    %66 = dma.general %s54, 2688, %s56, %s48, [#allocation7], [#allocation8], 0, 0
    %s67 = scalar_lea.hbm %s4, 72
    %s68 = scalar_lea.sflag [#allocation2], 3
    %s70 = sshll.u32 1, 14
    %s71 = sxor.u32 4294967295, %s70
    %s73 = sshll.u32 %s3, 4
    %s74 = int_to_ptr.hbm [resolvable:$true] %s73
    %s75 = sshll.u32 %s67, 4
    %s76 = int_to_ptr.hbm [resolvable:$true] %s75
    %80 = sst [smem:[#allocation10]] 384
    %s81 = scalar_lea.smem [#allocation10], 1
    %82 = sst [smem:[%s81]] 1536
    %s83 = scalar_lea.smem [#allocation10], 2
    %84 = sst [smem:[%s83]] 24
    %86 = dma.general %s74, 2688, %s76, %s68, [#allocation9], [#allocation10], 0, 0
    %s87 = smul.u32 8, 7
    %s88 = smul.u32 %s87, 3
    %s89 = sshll.u32 %s88, 4
    %90 = dma.done [#allocation2], %s89
    %s91 = sshll.u32 %s88, 4
    %92 = dma.done %s28, %s91
    %s93 = sshll.u32 %s88, 4
    %94 = dma.done %s48, %s93
    %s95 = sshll.u32 %s88, 4
    %96 = dma.done %s68, %s95
  %97 = vsyncmov [#allocation2]
  %s98 = vpop.sfrf %97
  %p99 = scmp.eq.s32.totalorder %s98, 0
  %p100 = pneg %p99
  %102 = shalt.err (%p100)
  %s103 = scalar_lea.sflag [#allocation2], 1
  %104 = vsyncmov %s103
  %s105 = vpop.sfrf %104
  %p106 = scmp.eq.s32.totalorder %s105, 0
  %p107 = pneg %p106
  %109 = shalt.err (%p107)
  %s110 = scalar_lea.sflag [#allocation2], 2
  %111 = vsyncmov %s110
  %s112 = vpop.sfrf %111
  %p113 = scmp.eq.s32.totalorder %s112, 0
  %p114 = pneg %p113
  %116 = shalt.err (%p114)
  %s117 = scalar_lea.sflag [#allocation2], 3
  %118 = vsyncmov %s117
  %s119 = vpop.sfrf %118
  %p120 = scmp.eq.s32.totalorder %s119, 0
  %p121 = pneg %p120
  %123 = shalt.err (%p121)

</llo_original>
